<compile_context>
chip_gen: v5e
topology: v5e:2x2
jax: 0.10.0
libtpu: 0.0.40
codegen_flags: <defaults>
</compile_context>

<pallas_src>
import functools

import jax
import jax.numpy as jnp
from jax.experimental import pallas as pl
from jax.experimental.pallas import tpu as pltpu


_MIB = 1024 * 1024
_SMALL_FALLBACK_BYTES = 64 * 1024      # below this, XLA's fused slice/sub is optimal


# ---------------------------------------------------------------------------
# Chip-aware sizing
# ---------------------------------------------------------------------------
@functools.lru_cache(maxsize=1)
def _chip_profile():
    """Returns (per-tile byte budget, explicit scoped-VMEM limit or None)."""
    kind = ""
    try:
        kind = jax.devices()[0].device_kind.lower()
    except Exception:
        pass
    if "v5 lite" in kind or "v5e" in kind or "v5lite" in kind:
        # v5e: least scoped-VMEM headroom -> small tiles, but raise the limit
        # explicitly instead of relying on the 16 MiB scoped default.
        return 2 * _MIB, 32 * _MIB
    if "v6" in kind:
        return 4 * _MIB, 64 * _MIB      # 128 MiB physical VMEM -> plenty of room
    if "v7" in kind or "7x" in kind:
        return 4 * _MIB, 48 * _MIB      # 64 MiB physical VMEM -> leave headroom
    return 2 * _MIB, None               # unknown chip: conservative defaults


def _compiler_params(vmem_limit):
    if vmem_limit is None:
        return pltpu.CompilerParams(dimension_semantics=("parallel",))
    return pltpu.CompilerParams(dimension_semantics=("parallel",),
                                vmem_limit_bytes=vmem_limit)


def _cost(n_elems, itemsize):
    return pl.CostEstimate(flops=3 * n_elems, transcendentals=0,
                           bytes_accessed=2 * n_elems * itemsize)


def _sublane_align(itemsize):
    # f32 packs 8 rows / vreg, bf16/f16 pack 16 -> keep tiles on those multiples.
    return 8 if itemsize >= 4 else 16


# ---------------------------------------------------------------------------
# Kernels
# ---------------------------------------------------------------------------
def _flat_kernel(x_ref, o_ref, *, L, F):
    """Lane-dense layout: tile (TB, L*F); `length` lives on the lane axis."""
    x = x_ref[...]                                   # (TB, L*F)
    LF = L * F
    prv = pltpu.roll(x, F, 1)        # prv[b, t*F+f] = x[b, (t-1)*F+f]  (wraps at t=0)
    nxt = pltpu.roll(x, LF - F, 1)   # nxt[b, t*F+f] = x[b, (t+1)*F+f]  (wraps at t=L-1)
    lane = jax.lax.broadcasted_iota(jnp.int32, x.shape, 1)
    out = jnp.where(lane < F, nxt - x,               # out[0]    = x[1]   - x[0]
          jnp.where(lane >= LF - F, x - prv,         # out[L-1]  = x[L-1] - x[L-2]
                    (nxt - prv) * 0.5))              # interior centred difference
    o_ref[...] = out.astype(o_ref.dtype)             # single unmasked full store


def _rows_kernel(x_ref, pos_ref, prev_ref, next_ref, o_ref, *, L, halo):
    """Sublane layout over the (B*L, F) view: batch fused onto rows, F on lanes.

    prev_ref / next_ref are small clamped halo blocks whose last / first row
    supply the neighbour rows that fall outside this tile; pos_ref[r] is the
    time index of global row r within its sequence (masks every wrap-around)."""
    x = x_ref[...]                                   # (TR, TF)
    tr = x.shape[0]
    pos = pos_ref[...]                               # (TR, 1) int32
    local = jax.lax.broadcasted_iota(jnp.int32, x.shape, 0)
    prv = pltpu.roll(x, 1, 0)                        # row above (wraps at tile edge)
    nxt = pltpu.roll(x, tr - 1, 0)                   # row below (wraps at tile edge)
    prv = jnp.where(local == 0, prev_ref[halo - 1:halo, :], prv)
    nxt = jnp.where(local == tr - 1, next_ref[0:1, :], nxt)
    out = jnp.where(pos == 0, nxt - x,
          jnp.where(pos == L - 1, x - prv,
                    (nxt - prv) * 0.5))
    o_ref[...] = out.astype(o_ref.dtype)             # single unmasked full store


# ---------------------------------------------------------------------------
# Wrappers
# ---------------------------------------------------------------------------
def _flat_path(x, budget, vmem_limit):
    """x: (B, L, F), F not lane-friendly but the whole row fits one tile."""
    B, L, F = x.shape
    itemsize = x.dtype.itemsize
    align = _sublane_align(itemsize)
    LF = L * F
    row_bytes = LF * itemsize
    xf = x.reshape(B, LF)

    if B <= align:
        tb = B                                        # block dim == full dim is legal
    else:
        cap = max(align, (budget // row_bytes) // align * align)
        tb = min(cap, (B // align) * align)
        if pl.cdiv(B, tb) < 2 and B >= 2 * align:     # keep >=2 steps (v7x dual-TC)
            tb = max(align, pl.cdiv(pl.cdiv(B, 2), align) * align)

    out = pl.pallas_call(
        functools.partial(_flat_kernel, L=L, F=F),
        out_shape=jax.ShapeDtypeStruct((B, LF), x.dtype),
        grid_spec=pltpu.PrefetchScalarGridSpec(
            num_scalar_prefetch=0,
            grid=(pl.cdiv(B, tb),),
            in_specs=[pl.BlockSpec((tb, LF), lambda b: (b, 0))],
            out_specs=pl.BlockSpec((tb, LF), lambda b: (b, 0)),
        ),
        compiler_params=_compiler_params(vmem_limit),
        cost_estimate=_cost(B * LF, itemsize),
    )(xf)
    return out.reshape(B, L, F)


def _rows_path(x, budget, vmem_limit, *, row_tile=None, lane_tile=None):
    """x: (B, L, F); sublane layout over (B*L, F) with halo rows between tiles."""
    B, L, F = x.shape
    itemsize = x.dtype.itemsize
    align = _sublane_align(itemsize)
    R = B * L
    x2 = x.reshape(R, F)
    # Per-row position within its sequence (computed once by XLA, tiny).
    pos = jnp.broadcast_to(jnp.arange(L, dtype=jnp.int32)[None, :],
                           (B, L)).reshape(R, 1)

    # Lane tile: prefer the full (contiguous) feature row; otherwise the largest
    # multiple-of-128 divisor of F whose minimum slab fits the budget.
    if lane_tile is not None:
        tf = lane_tile
    elif F % 128 != 0 or align * F * itemsize <= budget:
        tf = F
    else:
        tf = 128
        for cand in range(F // 128, 0, -1):
            c = 128 * cand
            if F % c == 0 and align * c * itemsize <= budget:
                tf = c
                break
    nf = pl.cdiv(F, tf)

    # Row tile: multiple of `align`, as many rows as the budget allows, and at
    # least 2 grid steps whenever the shape permits (balanced v7x megacore).
    if row_tile is not None:
        tr = row_tile
    else:
        cap = max(align, (budget // (tf * itemsize)) // align * align)
        tr = min(cap, (R // align) * align)
        if pl.cdiv(R, tr) * nf < 2 and R >= 2 * align:
            tr = max(align, pl.cdiv(pl.cdiv(R, 2), align) * align)
    nr = pl.cdiv(R, tr)
    rpb = max(tr // align, 1)            # halo blocks spanned by one row tile
    n_hblk = pl.cdiv(R, align)           # total halo blocks along the row axis

    out = pl.pallas_call(
        functools.partial(_rows_kernel, L=L, halo=align),
        out_shape=jax.ShapeDtypeStruct((R, F), x.dtype),
        grid_spec=pltpu.PrefetchScalarGridSpec(
            num_scalar_prefetch=0,
            grid=(nr * nf,),             # flattened 1-D parallel grid
            in_specs=[
                pl.BlockSpec((tr, tf), lambda i: (i // nf, i % nf)),
                pl.BlockSpec((tr, 1), lambda i: (i // nf, 0)),
                # halo block ending just above this tile (clamped at the top)
                pl.BlockSpec((align, tf),
                             lambda i: (jnp.maximum((i // nf) * rpb - 1, 0),
                                        i % nf)),
                # halo block starting just below this tile (clamped at the bottom)
                pl.BlockSpec((align, tf),
                             lambda i: (jnp.minimum((i // nf + 1) * rpb,
                                                    n_hblk - 1),
                                        i % nf)),
            ],
            out_specs=pl.BlockSpec((tr, tf), lambda i: (i // nf, i % nf)),
        ),
        compiler_params=_compiler_params(vmem_limit),
        cost_estimate=_cost(R * F, itemsize),
    )(x2, pos, x2, x2)
    return out.reshape(B, L, F)


def align_differential_ref(states):
    """Pure-JAX reference, direct transcription of the PyTorch forward."""
    padded = jnp.concatenate(
        [
            states[:, 0:1] * 2 - states[:, 1:2],
            states,
            states[:, -1:] * 2 - states[:, -2:-1],
        ],
        axis=1,
    )
    return (padded[:, 2:] - padded[:, :-2]) / 2


def align_differential(states, *, force_pallas=False):
    """AlignDifferential forward: states [batch, length, *] -> same shape."""
    assert states.ndim >= 2, "states must be [batch, length, *]"
    B, L = states.shape[0], states.shape[1]
    assert L >= 2, "AlignDifferential needs length >= 2"

    dtype = states.dtype
    # Integer inputs need true division to match PyTorch; exotic float widths
    # stay on the exact pure-JAX path.
    if not jnp.issubdtype(dtype, jnp.floating) or dtype.itemsize not in (2, 4):
        return align_differential_ref(states)

    F = 1
    for d in states.shape[2:]:
        F *= d
    if B == 0 or F == 0:
        return jnp.zeros(states.shape, dtype)

    itemsize = dtype.itemsize
    total_bytes = B * L * F * itemsize
    if total_bytes < _SMALL_FALLBACK_BYTES and not force_pallas:
        return align_differential_ref(states)       # dispatch overhead would dominate

    budget, vmem_limit = _chip_profile()
    align = _sublane_align(itemsize)
    x = states.reshape(B, L, F)

    if F % 128 == 0 and B * L >= align:
        # Lane-friendly features: sublane layout, batch fused, halo-tiled rows.
        out = _rows_path(x, budget, vmem_limit)
    elif min(B, align) * L * F * itemsize <= budget:
        # Small rows with odd feature widths: lane-dense flat layout.
        out = _flat_path(x, budget, vmem_limit)
    else:
        # TODO(synk): lane-halo tiling of the flattened L*F axis for huge rows
        # whose feature width is not 128-aligned; fall back to XLA for now.
        return align_differential_ref(states)
    return out.reshape(states.shape)


# ---------------------------------------------------------------------------
# Test
# ---------------------------------------------------------------------------
if __name__ == "__main__":
    key = jax.random.PRNGKey(0)
    k1, k2, k3, k4, k5 = jax.random.split(key, 5)

    # (1) Small [batch, length, *] input forced through the lane-dense flat path.
    x1 = jax.random.normal(k1, (2, 8, 4, 8), dtype=jnp.float32)
    out1 = align_differential(x1, force_pallas=True)
    jax.block_until_ready(out1)
    ref1 = align_differential_ref(x1)
    assert out1.shape == x1.shape and out1.dtype == x1.dtype
    assert jnp.allclose(out1, ref1, atol=1e-5, rtol=1e-5), "flat path mismatch (small)"

    # (2) Batch-fused flat path with >=2 grid steps (B=16 -> two 8-row tiles).
    x2 = jax.random.normal(k2, (16, 24, 6, 16), dtype=jnp.float32)
    out2 = align_differential(x2)
    jax.block_until_ready(out2)
    assert jnp.allclose(out2, align_differential_ref(x2), atol=1e-5, rtol=1e-5), \
        "flat path mismatch (batched)"

    # (3) 128-aligned feature width -> sublane (rows) path with automatic tiling.
    x3 = jax.random.normal(k3, (4, 64, 2048), dtype=jnp.float32)
    out3 = align_differential(x3)
    jax.block_until_ready(out3)
    assert jnp.allclose(out3, align_differential_ref(x3), atol=1e-5, rtol=1e-5), \
        "rows path mismatch (auto)"

    # (4) Forced small tiles on the rows path: exercises the clamped halo blocks,
    #     a ragged final row tile, and lane tiling (nf > 1).
    x4 = jax.random.normal(k4, (2, 20, 256), dtype=jnp.float32)
    budget, vmem_limit = _chip_profile()
    out4 = _rows_path(x4, budget, vmem_limit, row_tile=16, lane_tile=128)
    jax.block_until_ready(out4)
    assert jnp.allclose(out4, align_differential_ref(x4), atol=1e-5, rtol=1e-5), \
        "rows path mismatch (halo/ragged/lane-tiled)"

    # (5) bf16 goes through the rows path with 16-row sublane alignment.
    x5 = jax.random.normal(k5, (8, 32, 256), dtype=jnp.float32).astype(jnp.bfloat16)
    out5 = align_differential(x5)
    jax.block_until_ready(out5)
    ref5 = align_differential_ref(x5)
    assert out5.dtype == jnp.bfloat16
    assert jnp.allclose(out5.astype(jnp.float32), ref5.astype(jnp.float32),
                        atol=5e-2, rtol=5e-2), "rows path mismatch (bf16)"

    # (6) Tiny input takes the pure-JAX fallback (no kernel dispatch).
    out6 = align_differential(x1)
    assert jnp.allclose(out6, ref1, atol=1e-6, rtol=1e-6)

    print("KERNEL_OK")
</pallas_src>

<mosaic_0001>
module attributes {stable_mosaic.version = 11 : i64} {
  func.func @_flat_kernel(%arg0: i32, %arg1: memref<2x256xf32, #tpu.memory_space<vmem>>, %arg2: memref<2x256xf32, #tpu.memory_space<vmem>>) attributes {dimension_semantics = [#tpu.dimension_semantics<parallel>], iteration_bounds = array<i64: 1>, scalar_prefetch = 0 : i64, scratch_operands = 0 : i64, tpu.core_type = #tpu.core_type<tc>, window_params = [{transform_indices = @transform_0, window_bounds = array<i64: 2, 256>}, {transform_indices = @transform_1, window_bounds = array<i64: 2, 256>}]} {
    %c0 = arith.constant 0 : index
    %c0_0 = arith.constant 0 : index
    %0 = vector.load %arg1[%c0, %c0_0] : memref<2x256xf32, #tpu.memory_space<vmem>>, vector<2x256xf32>
    %c32_i32 = arith.constant 32 : i32
    %1 = tpu.dynamic_rotate %0 by %c32_i32 dim 1 : vector<2x256xf32>, i32 -> vector<2x256xf32>
    %c224_i32 = arith.constant 224 : i32
    %2 = tpu.dynamic_rotate %0 by %c224_i32 dim 1 : vector<2x256xf32>, i32 -> vector<2x256xf32>
    %3 = tpu.iota {dimensions = array<i32: 1>} : vector<2x256xi32>
    %c32_i32_1 = arith.constant 32 : i32
    %4 = vector.broadcast %c32_i32_1 : i32 to vector<2x256xi32>
    %5 = arith.cmpi slt, %3, %4 : vector<2x256xi32>
    %6 = arith.subf %2, %0 : vector<2x256xf32>
    %c224_i32_2 = arith.constant 224 : i32
    %7 = vector.broadcast %c224_i32_2 : i32 to vector<2x256xi32>
    %8 = arith.cmpi sge, %3, %7 : vector<2x256xi32>
    %9 = arith.subf %0, %1 : vector<2x256xf32>
    %10 = arith.subf %2, %1 : vector<2x256xf32>
    %cst = arith.constant 5.000000e-01 : f32
    %11 = vector.broadcast %cst : f32 to vector<2x256xf32>
    %12 = arith.mulf %10, %11 : vector<2x256xf32>
    %13 = arith.select %8, %9, %12 : vector<2x256xi1>, vector<2x256xf32>
    %14 = arith.select %5, %6, %13 : vector<2x256xi1>, vector<2x256xf32>
    %c0_3 = arith.constant 0 : index
    %c0_4 = arith.constant 0 : index
    %15 = vector.load %arg2[%c0_3, %c0_4] : memref<2x256xf32, #tpu.memory_space<vmem>>, vector<2x256xf32>
    tpu.vector_store %arg2[%c0_3, %c0_4], %14 {strides = array<i32>} : memref<2x256xf32, #tpu.memory_space<vmem>>, vector<2x256xf32>,
    return
  }
  func.func @transform_0(%arg0: i32) -> (i32, i32) {
    %c0_i32 = arith.constant 0 : i32
    %c0_i32_0 = arith.constant 0 : i32
    return %arg0, %c0_i32 : i32, i32
  }
  func.func @transform_1(%arg0: i32) -> (i32, i32) {
    %c0_i32 = arith.constant 0 : i32
    %c0_i32_0 = arith.constant 0 : i32
    return %arg0, %c0_i32 : i32, i32
  }
}

</mosaic_0001>

<llo_original>
// kernel: tpu_custom_call.1
$region0: #{tpu_custom_call.1}
  #allocation0 [shape = 'u32[]', space=smem, size = 0x4, offset = 0x4, fixed_abs, tag = 'smem constant byte address 0x4 - core index']
  #allocation1 [shape = 'u32[72,128]{1,0:T(1,128)}', space=vmem, size = 0x9000, scoped, tag = 'internal scratch']
  %s0 = inlined_call_operand.hbm [shape: f32[2,256], index: 0, kind: input, shape index: {}]
  %s1 = inlined_call_operand.hbm [shape: f32[2,256], index: 1, kind: output, shape index: {}]
  %s2 = sld [smem:[#allocation0]]
  $region18: #{tpu_custom_call.1} parent=0
    _
  %s4 = ssub.s32 1, %s2
  %s5 = scalar_select 0, %s4, %s2
  $region1: #{tpu_custom_call.1} parent=0
    #allocation2 [shape = 'u8[2048]{0}', space=vmem, size = 0x800, scoped, tag = 'input window, operand 0, single buffered']
    #allocation3 [shape = 's32[1]{0}', space=sflag, size = 0x4, scoped, tag = 'scoped memory for tpu_custom_call.1']
    #allocation4 [shape = 's32[1]{0}', space=sflag, size = 0x4, scoped, tag = 'scoped memory for tpu_custom_call.1']
    #allocation5 [shape = 'u8[2048]{0}', space=vmem, size = 0x800, scoped, tag = 'output window, operand 0, single buffered']
    %6 = vsyncpa [#allocation3], 0
    %7 = vsyncpa [#allocation4], 0
    // Predicated region
    $region2: #{tpu_custom_call.1} parent=1 // pred_check
      _
    $region3: #{tpu_custom_call.1} parent=1 // pred_check_branch
      %9 = sbr.rel (0) target = $region5
    $region4: #{tpu_custom_call.1} parent=1 // pred_region
      %11 = vsyncadd [#allocation3], 0
      %s13 = sshll.u32 %s0, 4
      %s14 = int_to_ptr.hbm [resolvable:$true] %s13
      %s15 = sshll.u32 [#allocation2], 4
      %s16 = int_to_ptr.vmem [resolvable:$true] %s15
      %18 = dma.hbm_to_vmem [thread:$0]  %s14, 64, %s16, [#allocation3]
    $region5: #{tpu_custom_call.1} parent=1 // pred_fallthru
      _
    // Predicated region
    $region6: #{tpu_custom_call.1} parent=1 // pred_check
      _
    $region7: #{tpu_custom_call.1} parent=1 // pred_check_branch
      %20 = sbr.rel (0) target = $region9
    $region8: #{tpu_custom_call.1} parent=1 // pred_region
      %22 = dma.done [#allocation3], 64
    $region9: #{tpu_custom_call.1} parent=1 // pred_fallthru
      _
    %v23 = vld [vmem:[#allocation2] sm:$0xf]
    %25 = vst [vmem:[#allocation1] ss:$4 sm:$0xff] %v23
    %v26 = vld.sshfl [vmem:[#allocation1] sm:$0xff pattern:$0x73625140]
    %v27 = vld.sshfl [vmem:[#allocation1 + $0x8] sm:$0xff pattern:$0x73625140]
    %30 = vrot.lane.b32.xlu0 %v26, 32
    %v31 = vpop.permute.xlu0 %30
    %32 = vrot.lane.b32.xlu0 %v27, 32
    %v33 = vpop.permute.xlu0 %32
    %v34 = vlaneseq
    %v35 = vand.u32 %v34, 127
    %vm36 = vcmp.lt.s32.totalorder %v35, 32
    %v37 = vsel %vm36, %v31, %v33
    %v38 = vsel %vm36, %v33, %v31
    %39 = vst [vmem:[#allocation1] ss:$4 sm:$0xff] %v23
    %v40 = vld.sshfl [vmem:[#allocation1] sm:$0xff pattern:$0x73625140]
    %v41 = vld.sshfl [vmem:[#allocation1 + $0x8] sm:$0xff pattern:$0x73625140]
    %44 = vrot.lane.b32.xlu0 %v40, 96
    %v45 = vpop.permute.xlu0 %44
    %46 = vrot.lane.b32.xlu0 %v41, 96
    %v47 = vpop.permute.xlu0 %46
    %vm48 = vcmp.lt.s32.totalorder %v35, 96
    %v49 = vsel %vm48, %v45, %v47
    %v50 = vsel %vm48, %v47, %v45
    %v51 = vadd.s32 %v35, 128
    %vm52 = vcmp.lt.s32.totalorder %v51, 32
    %53 = vst [vmem:[#allocation1] ss:$4 sm:$0xff] %v23
    %v54 = vld.sshfl [vmem:[#allocation1] sm:$0xff pattern:$0x73625140]
    %v55 = vld.sshfl [vmem:[#allocation1 + $0x8] sm:$0xff pattern:$0x73625140]
    %v58 = vsub.f32 %v49, %v54
    %v59 = vsub.f32 %v50, %v55
    %vm60 = vcmp.ge.s32.totalorder %v35, 224
    %vm61 = vcmp.ge.s32.totalorder %v51, 224
    %v64 = vrot.slane %v37, 6
    %vm65 = vcmask 1041408
    %v66 = vsel %vm65, %v38, %v64
    %v68 = vsub.f32 %v23, %v66
    %v69 = vsub.f32 %v49, %v38
    %v70 = vsub.f32 %v50, %v37
    %v71 = vmul.f32 %v69, 0.5
    %v72 = vmul.f32 %v70, 0.5
    %74 = vst [vmem:[#allocation1] ss:$4 sm:$0xff] %v68
    %v75 = vld.sshfl [vmem:[#allocation1] sm:$0xff pattern:$0x73625140]
    %v76 = vld.sshfl [vmem:[#allocation1 + $0x8] sm:$0xff pattern:$0x73625140]
    %v79 = vsel %vm60, %v75, %v71
    %v80 = vsel %vm61, %v76, %v72
    %v81 = vsel %vm36, %v58, %v79
    %v82 = vsel %vm52, %v59, %v80
    %v85 = vrot.slane %v82, 6
    %v86 = vsel %vm65, %v81, %v85
    %88 = vst [vmem:[#allocation5] sm:$0xf] %v86
    // Predicated region
    $region10: #{tpu_custom_call.1} parent=1 // pred_check
      _
    $region11: #{tpu_custom_call.1} parent=1 // pred_check_branch
      %90 = sbr.rel (0) target = $region13
    $region12: #{tpu_custom_call.1} parent=1 // pred_region
      %92 = vsyncadd [#allocation4], 0
      %s94 = sshll.u32 [#allocation5], 4
      %s95 = int_to_ptr.vmem [resolvable:$true] %s94
      %s96 = sshll.u32 %s1, 4
      %s97 = int_to_ptr.hbm [resolvable:$true] %s96
      %99 = dma.vmem_to_hbm [thread:$0]  %s95, 64, %s97, [#allocation4]
    $region13: #{tpu_custom_call.1} parent=1 // pred_fallthru
      _
    // Predicated region
    $region14: #{tpu_custom_call.1} parent=1 // pred_check
      _
    $region15: #{tpu_custom_call.1} parent=1 // pred_check_branch
      %101 = sbr.rel (0) target = $region17
    $region16: #{tpu_custom_call.1} parent=1 // pred_region
      %103 = dma.done [#allocation4], 64
    $region17: #{tpu_custom_call.1} parent=1 // pred_fallthru
      _
    %104 = vsyncpa [#allocation3], 1
    %105 = vsyncpa [#allocation4], 1

</llo_original>
